<compile_context>
chip_gen: v6e
topology: v6e:2x2x1
jax: 0.10.0
libtpu: 0.0.40
codegen_flags: <defaults>
</compile_context>

<pallas_src>
import functools
import math

import jax
import jax.numpy as jnp
from jax.experimental import pallas as pl
from jax.experimental.pallas import tpu as pltpu


# Use the VMEM-resident one-hot/MXU gather only for small vocabularies where
# the wasted FLOPs (proportional to V) are negligible and the table is a few
# MiB at most (safe on v7x's 64 MiB VMEM as well as v5e/v6e's 128 MiB).
_ONE_HOT_MAX_VOCAB = 1024
_ONE_HOT_MAX_TABLE_BYTES = 8 * 1024 * 1024
_VMEM_LIMIT_BYTES = 32 * 1024 * 1024
# TODO(synk): mid-size tables that fit VMEM but exceed the one-hot vocab limit
# currently take the HBM-DMA path; an in-VMEM dynamic-row gather would let
# them stream the table from HBM only once.


def _embed_onehot_kernel(ids_ref, w_ref, o_ref, *, tb: int):
    """Small-vocab path: table resident in VMEM, gather via one-hot @ table."""
    vocab = w_ref.shape[0]
    base = pl.program_id(0) * tb
    col_ids = jax.lax.broadcasted_iota(jnp.int32, (1, vocab), 1)  # (1, V)
    rows = []
    for t in range(tb):                       # static unroll, tb is small
        idx = ids_ref[base + t]               # scalar token id from SMEM
        rows.append((col_ids == idx).astype(w_ref.dtype))
    one_hot = jnp.concatenate(rows, axis=0)   # (tb, V)
    # MXU gather; exact (one-hot rows) and a single full-tile unmasked store.
    o_ref[...] = jnp.dot(
        one_hot, w_ref[...], preferred_element_type=jnp.float32
    ).astype(o_ref.dtype)


def _embed_dma_kernel(ids_ref, w_hbm_ref, o_ref, sems, *, tb: int):
    """Large-vocab path: per-token DMA straight from HBM into the output tile."""
    base = pl.program_id(0) * tb
    copies = []
    for t in range(tb):                       # keep all tb gather DMAs in flight
        idx = ids_ref[base + t]
        cp = pltpu.make_async_copy(
            w_hbm_ref.at[pl.ds(idx, 1), :],   # data-dependent HBM source row
            o_ref.at[pl.ds(t, 1), :],         # straight into the output block
            sems.at[t],
        )
        cp.start()
        copies.append(cp)
    for cp in copies:
        cp.wait()


def embedding_lookup(token_ids: jax.Array, weight: jax.Array,
                     *, force_dma: bool = False) -> jax.Array:
    """Pallas equivalent of `weight[token_ids]` -> (B, S, D)."""
    B, S = token_ids.shape
    V, D = weight.shape
    itemsize = jnp.dtype(weight.dtype).itemsize

    # Tokens per grid step: one full sublane tile for the weight dtype
    # (8 for f32, 16 for bf16, 32 for int8/fp8).
    tb = 8 * max(1, 4 // itemsize)

    N = B * S
    n_pad = ((N + tb - 1) // tb) * tb
    flat_ids = token_ids.reshape(N).astype(jnp.int32)
    if n_pad != N:
        flat_ids = jnp.pad(flat_ids, (0, n_pad - N))  # pad with id 0 (valid row)

    grid = (n_pad // tb,)
    out_spec = pl.BlockSpec((tb, D), lambda i, ids: (i, 0))
    compiler_params = pltpu.CompilerParams(
        dimension_semantics=("parallel",),     # token axis is embarrassingly parallel
        vmem_limit_bytes=_VMEM_LIMIT_BYTES,
    )

    table_bytes = V * D * itemsize
    use_onehot = (
        not force_dma
        and V <= _ONE_HOT_MAX_VOCAB
        and table_bytes <= _ONE_HOT_MAX_TABLE_BYTES
    )

    if use_onehot:
        grid_spec = pltpu.PrefetchScalarGridSpec(
            num_scalar_prefetch=1,
            grid=grid,
            # Constant index_map -> the table is DMA'd into VMEM once and
            # stays resident across all grid steps.
            in_specs=[pl.BlockSpec((V, D), lambda i, ids: (0, 0))],
            out_specs=out_spec,
        )
        kernel = functools.partial(_embed_onehot_kernel, tb=tb)
    else:
        grid_spec = pltpu.PrefetchScalarGridSpec(
            num_scalar_prefetch=1,
            grid=grid,
            in_specs=[pl.BlockSpec(memory_space=pl.ANY)],  # weight stays in HBM
            out_specs=out_spec,
            scratch_shapes=[pltpu.SemaphoreType.DMA((tb,))],
        )
        kernel = functools.partial(_embed_dma_kernel, tb=tb)

    out_flat = pl.pallas_call(
        kernel,
        out_shape=jax.ShapeDtypeStruct((n_pad, D), weight.dtype),
        grid_spec=grid_spec,
        compiler_params=compiler_params,
    )(flat_ids, weight)

    return out_flat[:N].reshape(B, S, D)


def init_embedding_weight(key, num_embeddings: int, embedding_dim: int,
                          dtype=jnp.float32) -> jax.Array:
    """Deterministic trunc-normal init matching the PyTorch module."""
    std = math.sqrt(2.0 / (num_embeddings + embedding_dim))
    # trunc_normal_(mean=0, std=std, a=-3*std, b=3*std)
    w = jax.random.truncated_normal(
        key, -3.0, 3.0, (num_embeddings, embedding_dim), dtype=jnp.float32
    ) * std
    return w.astype(dtype)


if __name__ == "__main__":
    key = jax.random.PRNGKey(0)
    k_w, k_ids = jax.random.split(key)

    num_embeddings = 64    # vocab size
    embedding_dim = 128    # lane-dense embedding dim
    batch, seq = 2, 8

    weight = init_embedding_weight(k_w, num_embeddings, embedding_dim)
    token_ids = jax.random.randint(k_ids, (batch, seq), 0, num_embeddings,
                                   dtype=jnp.int32)
    ref = weight[token_ids]

    # Small-vocab path: VMEM-resident table + one-hot MXU gather.
    out = embedding_lookup(token_ids, weight)
    out = jax.block_until_ready(out)
    assert out.shape == (batch, seq, embedding_dim)
    assert out.dtype == weight.dtype
    assert jnp.allclose(out, ref), "one-hot path mismatch vs reference"

    # Large-vocab fallback (forced here at small sizes): per-row HBM DMAs
    # written directly into the output block, TB copies in flight per step.
    out_dma = embedding_lookup(token_ids, weight, force_dma=True)
    out_dma = jax.block_until_ready(out_dma)
    assert jnp.allclose(out_dma, ref), "DMA gather path mismatch vs reference"

    print("KERNEL_OK")
</pallas_src>

<mosaic_0001>
module attributes {stable_mosaic.version = 11 : i64} {
  func.func @_embed_onehot_kernel(%arg0: i32, %arg1: memref<16xi32, #tpu.memory_space<smem>>, %arg2: memref<64x128xf32, #tpu.memory_space<vmem>>, %arg3: memref<8x128xf32, #tpu.memory_space<vmem>>) attributes {dimension_semantics = [#tpu.dimension_semantics<parallel>], iteration_bounds = array<i64: 2>, scalar_prefetch = 1 : i64, scratch_operands = 0 : i64, tpu.core_type = #tpu.core_type<tc>, window_params = [{pipeline_mode = #tpu.pipeline_mode<synchronous>, transform_indices = @transform_0, window_bounds = array<i64: 64, 128>}, {transform_indices = @transform_1, window_bounds = array<i64: 8, 128>}]} {
    %c8_i32 = arith.constant 8 : i32
    %0 = arith.muli %arg0, %c8_i32 : i32
    %1 = tpu.iota {dimensions = array<i32: 1>} : vector<1x64xi32>
    %c0_i32 = arith.constant 0 : i32
    %2 = arith.addi %0, %c0_i32 : i32
    %3 = arith.index_cast %2 : i32 to index
    %4 = memref.load %arg1[%3] : memref<16xi32, #tpu.memory_space<smem>>
    %5 = vector.broadcast %4 : i32 to vector<1x64xi32>
    %6 = arith.cmpi eq, %1, %5 : vector<1x64xi32>
    %7 = arith.extui %6 : vector<1x64xi1> to vector<1x64xi32>
    %8 = arith.sitofp %7 : vector<1x64xi32> to vector<1x64xf32>
    %c1_i32 = arith.constant 1 : i32
    %9 = arith.addi %0, %c1_i32 : i32
    %10 = arith.index_cast %9 : i32 to index
    %11 = memref.load %arg1[%10] : memref<16xi32, #tpu.memory_space<smem>>
    %12 = vector.broadcast %11 : i32 to vector<1x64xi32>
    %13 = arith.cmpi eq, %1, %12 : vector<1x64xi32>
    %14 = arith.extui %13 : vector<1x64xi1> to vector<1x64xi32>
    %15 = arith.sitofp %14 : vector<1x64xi32> to vector<1x64xf32>
    %c2_i32 = arith.constant 2 : i32
    %16 = arith.addi %0, %c2_i32 : i32
    %17 = arith.index_cast %16 : i32 to index
    %18 = memref.load %arg1[%17] : memref<16xi32, #tpu.memory_space<smem>>
    %19 = vector.broadcast %18 : i32 to vector<1x64xi32>
    %20 = arith.cmpi eq, %1, %19 : vector<1x64xi32>
    %21 = arith.extui %20 : vector<1x64xi1> to vector<1x64xi32>
    %22 = arith.sitofp %21 : vector<1x64xi32> to vector<1x64xf32>
    %c3_i32 = arith.constant 3 : i32
    %23 = arith.addi %0, %c3_i32 : i32
    %24 = arith.index_cast %23 : i32 to index
    %25 = memref.load %arg1[%24] : memref<16xi32, #tpu.memory_space<smem>>
    %26 = vector.broadcast %25 : i32 to vector<1x64xi32>
    %27 = arith.cmpi eq, %1, %26 : vector<1x64xi32>
    %28 = arith.extui %27 : vector<1x64xi1> to vector<1x64xi32>
    %29 = arith.sitofp %28 : vector<1x64xi32> to vector<1x64xf32>
    %c4_i32 = arith.constant 4 : i32
    %30 = arith.addi %0, %c4_i32 : i32
    %31 = arith.index_cast %30 : i32 to index
    %32 = memref.load %arg1[%31] : memref<16xi32, #tpu.memory_space<smem>>
    %33 = vector.broadcast %32 : i32 to vector<1x64xi32>
    %34 = arith.cmpi eq, %1, %33 : vector<1x64xi32>
    %35 = arith.extui %34 : vector<1x64xi1> to vector<1x64xi32>
    %36 = arith.sitofp %35 : vector<1x64xi32> to vector<1x64xf32>
    %c5_i32 = arith.constant 5 : i32
    %37 = arith.addi %0, %c5_i32 : i32
    %38 = arith.index_cast %37 : i32 to index
    %39 = memref.load %arg1[%38] : memref<16xi32, #tpu.memory_space<smem>>
    %40 = vector.broadcast %39 : i32 to vector<1x64xi32>
    %41 = arith.cmpi eq, %1, %40 : vector<1x64xi32>
    %42 = arith.extui %41 : vector<1x64xi1> to vector<1x64xi32>
    %43 = arith.sitofp %42 : vector<1x64xi32> to vector<1x64xf32>
    %c6_i32 = arith.constant 6 : i32
    %44 = arith.addi %0, %c6_i32 : i32
    %45 = arith.index_cast %44 : i32 to index
    %46 = memref.load %arg1[%45] : memref<16xi32, #tpu.memory_space<smem>>
    %47 = vector.broadcast %46 : i32 to vector<1x64xi32>
    %48 = arith.cmpi eq, %1, %47 : vector<1x64xi32>
    %49 = arith.extui %48 : vector<1x64xi1> to vector<1x64xi32>
    %50 = arith.sitofp %49 : vector<1x64xi32> to vector<1x64xf32>
    %c7_i32 = arith.constant 7 : i32
    %51 = arith.addi %0, %c7_i32 : i32
    %52 = arith.index_cast %51 : i32 to index
    %53 = memref.load %arg1[%52] : memref<16xi32, #tpu.memory_space<smem>>
    %54 = vector.broadcast %53 : i32 to vector<1x64xi32>
    %55 = arith.cmpi eq, %1, %54 : vector<1x64xi32>
    %56 = arith.extui %55 : vector<1x64xi1> to vector<1x64xi32>
    %57 = arith.sitofp %56 : vector<1x64xi32> to vector<1x64xf32>
    %58 = tpu.concatenate %8, %15, %22, %29, %36, %43, %50, %57 in 0 : vector<1x64xf32>, vector<1x64xf32>, vector<1x64xf32>, vector<1x64xf32>, vector<1x64xf32>, vector<1x64xf32>, vector<1x64xf32>, vector<1x64xf32> -> vector<8x64xf32>
    %c0 = arith.constant 0 : index
    %c0_0 = arith.constant 0 : index
    %59 = vector.load %arg2[%c0, %c0_0] : memref<64x128xf32, #tpu.memory_space<vmem>>, vector<64x128xf32>
    %cst = arith.constant dense<0.000000e+00> : vector<8x128xf32>
    %60 = tpu.matmul %58, %59, %cst {dimension_numbers = #tpu.dot_dimension_numbers<[1], [0], [0], [1], [0, 0, 1, 1], [], []>} : vector<8x64xf32>, vector<64x128xf32>, vector<8x128xf32> -> vector<8x128xf32>
    %c0_1 = arith.constant 0 : index
    %c0_2 = arith.constant 0 : index
    %61 = vector.load %arg3[%c0_1, %c0_2] : memref<8x128xf32, #tpu.memory_space<vmem>>, vector<8x128xf32>
    tpu.vector_store %arg3[%c0_1, %c0_2], %60 {strides = array<i32>} : memref<8x128xf32, #tpu.memory_space<vmem>>, vector<8x128xf32>,
    return
  }
  func.func @transform_0(%arg0: i32, %arg1: memref<16xi32, #tpu.memory_space<smem>>) -> (i32, i32) {
    %c0_i32 = arith.constant 0 : i32
    %c0_i32_0 = arith.constant 0 : i32
    %c0_i32_1 = arith.constant 0 : i32
    return %c0_i32, %c0_i32_0 : i32, i32
  }
  func.func @transform_1(%arg0: i32, %arg1: memref<16xi32, #tpu.memory_space<smem>>) -> (i32, i32) {
    %c0_i32 = arith.constant 0 : i32
    %c0_i32_0 = arith.constant 0 : i32
    return %arg0, %c0_i32 : i32, i32
  }
}

</mosaic_0001>

<llo_original>
// kernel: tpu_custom_call.1
$region0: #{tpu_custom_call.1}
  #allocation0 [shape = 'u32[]', space=smem, size = 0x4, offset = 0x4, fixed_abs, tag = 'smem constant byte address 0x4 - core index']
  #allocation1 [shape = 'u32[144,128]{1,0:T(1,128)}', space=vmem, size = 0x12000, scoped, tag = 'internal scratch']
  #allocation2 [shape = 's32[1]{0}', space=sflag, size = 0x4, scoped, tag = 'scoped memory for tpu_custom_call.1']
  #allocation3 [shape = 'u8[512]{0}', space=smem, size = 0x200, scoped, tag = 'prefetched SMEM operand 0']
  %s0 = inlined_call_operand.hbm [shape: s32[16], index: 0, kind: input, shape index: {}]
  %s1 = inlined_call_operand.hbm [shape: f32[64,128], index: 1, kind: input, shape index: {}]
  %s2 = inlined_call_operand.hbm [shape: f32[16,128], index: 2, kind: output, shape index: {}]
  %s3 = sld [smem:[#allocation0]]
  $region41: #{tpu_custom_call.1} parent=0
    _
  %s5 = ssub.s32 1, %s3
  %s6 = scalar_select 0, %s5, %s3
  %8 = dma.hbm_to_smem %s0, 16, [#allocation3], [#allocation2]
  %9 = dma.done [#allocation2], 16
  %10 = sfence
  $region1: #{tpu_custom_call.1} parent=0
    #allocation4 [shape = 'u8[32768]{0}', space=vmem, size = 0x8000, scoped, tag = 'input window, operand 1, single buffered']
    #allocation5 [shape = 's32[2]{0}', space=sflag, size = 0x8, scoped, tag = 'scoped memory for tpu_custom_call.1']
    #allocation6 [shape = 's32[2]{0}', space=sflag, size = 0x8, scoped, tag = 'scoped memory for tpu_custom_call.1']
    #allocation7 [shape = 'u8[8192]{0}', space=vmem, size = 0x2000, scoped, tag = 'output window, operand 0']
    %11 = vsyncpa [#allocation5], 0
    %12 = vsyncpa [#allocation6], 0
    %s13 = scalar_lea.sflag [#allocation6], 1
    %14 = vsyncpa %s13, 0
    loop: start=0, step=1, limit=4
    $region2: #{tpu_custom_call.1} parent=1 // loop_pre_header
      _
    $region3: #{tpu_custom_call.1} parent=1 // loop_header
      %s16 = sphi 0, %s20
      %p17 = scmp.ge.s32.totalorder %s16, 4
      %s24 = sphi 0, %s24
      %s26 = sphi 0, %s24
      %s27 = sphi 0, %s26
      %s41 = sphi 0, %s27
      %s47 = sphi 0, %s49
      %s50 = sphi 0, %s47
      %s51 = sphi 0, %s50
      %s67 = sphi 0, %s51
    $region4: #{tpu_custom_call.1} parent=1 // loop_header_branch
      %19 = sbr.rel (%p17) target = $region8
    $region5: #{tpu_custom_call.1} parent=1 // loop_body
      %s21 = ssub.s32 %s16, 1
      %s22 = ssub.s32 %s16, 2
      %s23 = sadd.s32 %s16, 1
      %s25 = sadd.s32 %s24, 1
      %p28 = scmp.eq.s32.totalorder %s16, 1
      %p29 = scmp.ne.s32.totalorder %s24, %s26
      %p30 = scmp.eq.s32.totalorder %s16, 0
      %p31 = por %p29, %p30
      %p32 = scmp.ne.s32.totalorder %s24, %s26
      %p33 = scmp.eq.s32.totalorder %s21, 1
      %p34 = por %p32, %p33
      %p35 = scmp.ne.s32.totalorder %s26, %s27
      %p36 = scmp.eq.s32.totalorder %s21, 0
      %p37 = por %p35, %p36
      %p38 = scmp.ne.s32.totalorder %s26, %s27
      %p39 = scmp.eq.s32.totalorder %s22, 1
      %p40 = por %p38, %p39
      %p42 = scmp.ne.s32.totalorder %s27, %s41
      %p43 = scmp.eq.s32.totalorder %s22, 0
      %p44 = por %p42, %p43
      %s45 = ssub.s32 %s16, %s23
      %p46 = scmp.eq.s32.totalorder %s45, 0
      %s48 = sadd.s32 %s47, 1
      %s49 = scalar_select %p46, %s47, %s48
      %p52 = pneg %p46
      %p53 = scmp.eq.s32.totalorder %s16, 1
      %p54 = por %p52, %p53
      %p55 = scmp.ne.s32.totalorder %s47, %s50
      %p56 = scmp.eq.s32.totalorder %s16, 0
      %p57 = por %p55, %p56
      %p58 = scmp.ne.s32.totalorder %s47, %s50
      %p59 = scmp.eq.s32.totalorder %s21, 1
      %p60 = por %p58, %p59
      %p61 = scmp.ne.s32.totalorder %s50, %s51
      %p62 = scmp.eq.s32.totalorder %s21, 0
      %p63 = por %p61, %p62
      %p64 = scmp.ne.s32.totalorder %s50, %s51
      %p65 = scmp.eq.s32.totalorder %s22, 1
      %p66 = por %p64, %p65
      %p68 = scmp.ne.s32.totalorder %s51, %s67
      %p69 = scmp.eq.s32.totalorder %s22, 0
      %p70 = por %p68, %p69
      %p71 = scmp.le.s32.totalorder 1, %s16
      %p72 = scmp.lt.s32.totalorder %s16, 3
      %p73 = pnand %p71, %p72
      %p74 = pneg %p73
      // Predicated region
      $region9: #{tpu_custom_call.1} parent=5 // pred_check
        _
      $region10: #{tpu_custom_call.1} parent=5 // pred_check_branch
        %76 = sbr.rel (%p73) target = $region12
      $region11: #{tpu_custom_call.1} parent=5 // pred_region
        %s77 = ssub.s32 %s16, 1
        // Predicated region
        $region13: #{tpu_custom_call.1} parent=11 // pred_check
          %p78 = pneg %p37
        $region14: #{tpu_custom_call.1} parent=11 // pred_check_branch
          %80 = sbr.rel (%p78) target = $region16
        $region15: #{tpu_custom_call.1} parent=11 // pred_region
          %s82 = ssub.s32 1024, 1024
          %83 = vsyncadd [#allocation5], %s82
          %s84 = sshll.u32 [#allocation4], 4
          %s85 = int_to_ptr.vmem [resolvable:$true] %s84
          %90 = dma.hbm_to_vmem [thread:$0]  %s1, 1024, %s85, [#allocation5], 128, 128, 8
        $region16: #{tpu_custom_call.1} parent=11 // pred_fallthru
          _
      $region12: #{tpu_custom_call.1} parent=5 // pred_fallthru
        _
      %p91 = scmp.lt.s32.totalorder %s16, 2
      // Predicated region
      $region17: #{tpu_custom_call.1} parent=5 // pred_check
        %p92 = pneg %p91
      $region18: #{tpu_custom_call.1} parent=5 // pred_check_branch
        %94 = sbr.rel (%p92) target = $region20
      $region19: #{tpu_custom_call.1} parent=5 // pred_region
        _
      $region20: #{tpu_custom_call.1} parent=5 // pred_fallthru
        _
      %p95 = scmp.le.s32.totalorder 1, %s16
      %p96 = scmp.lt.s32.totalorder %s16, 3
      %p97 = pnand %p95, %p96
      %p98 = pneg %p97
      // Predicated region
      $region21: #{tpu_custom_call.1} parent=5 // pred_check
        _
      $region22: #{tpu_custom_call.1} parent=5 // pred_check_branch
        %100 = sbr.rel (%p97) target = $region24
      $region23: #{tpu_custom_call.1} parent=5 // pred_region
        %s101 = ssub.s32 %s16, 1
        // Predicated region
        $region25: #{tpu_custom_call.1} parent=23 // pred_check
          %p102 = pneg %p37
        $region26: #{tpu_custom_call.1} parent=23 // pred_check_branch
          %104 = sbr.rel (%p102) target = $region28
        $region27: #{tpu_custom_call.1} parent=23 // pred_region
          %105 = dma.done [#allocation5], 1024
        $region28: #{tpu_custom_call.1} parent=23 // pred_fallthru
          _
        %p106 = pneg %p37
        %p107 = pneg %p34
        %p108 = pneg %p63
        %p109 = pneg %p60
        %s110 = sand.u32 %s50, 1
        %s111 = scalar_lea.sflag [#allocation6], %s110
        %s112 = sand.u32 %s50, 1
        %s113 = smul.addr %s112, 8
        %s114 = scalar_lea.vmem [#allocation7], %s113
        %s115 = smul.u32 %s21, 8
        %v116 = vlaneseq
        %v117 = vand.u32 %v116, 127
        %s118 = sld [smem:[#allocation3 + %s115]]
        %v119 = vstv %s118
        %vm120 = vcmp.eq.s32.totalorder %v117, %v119
        %v121 = vsel %vm120, 1, 0
        %v122 = vcvt.s32.f32 %v121
        %s123 = sadd.s32 %s115, 1
        %s124 = sld [smem:[#allocation3 + %s123]]
        %v125 = vstv %s124
        %vm126 = vcmp.eq.s32.totalorder %v117, %v125
        %v127 = vsel %vm126, 1, 0
        %v128 = vcvt.s32.f32 %v127
        %s129 = sadd.s32 %s115, 2
        %s130 = sld [smem:[#allocation3 + %s129]]
        %v131 = vstv %s130
        %vm132 = vcmp.eq.s32.totalorder %v117, %v131
        %v133 = vsel %vm132, 1, 0
        %v134 = vcvt.s32.f32 %v133
        %s135 = sadd.s32 %s115, 3
        %s136 = sld [smem:[#allocation3 + %s135]]
        %v137 = vstv %s136
        %vm138 = vcmp.eq.s32.totalorder %v117, %v137
        %v139 = vsel %vm138, 1, 0
        %v140 = vcvt.s32.f32 %v139
        %s141 = sadd.s32 %s115, 4
        %s142 = sld [smem:[#allocation3 + %s141]]
        %v143 = vstv %s142
        %vm144 = vcmp.eq.s32.totalorder %v117, %v143
        %v145 = vsel %vm144, 1, 0
        %v146 = vcvt.s32.f32 %v145
        %s147 = sadd.s32 %s115, 5
        %s148 = sld [smem:[#allocation3 + %s147]]
        %v149 = vstv %s148
        %vm150 = vcmp.eq.s32.totalorder %v117, %v149
        %v151 = vsel %vm150, 1, 0
        %v152 = vcvt.s32.f32 %v151
        %s153 = sadd.s32 %s115, 6
        %s154 = sld [smem:[#allocation3 + %s153]]
        %v155 = vstv %s154
        %vm156 = vcmp.eq.s32.totalorder %v117, %v155
        %v157 = vsel %vm156, 1, 0
        %v158 = vcvt.s32.f32 %v157
        %s159 = sadd.s32 %s115, 7
        %s160 = sld [smem:[#allocation3 + %s159]]
        %v161 = vstv %s160
        %vm162 = vcmp.eq.s32.totalorder %v117, %v161
        %v163 = vsel %vm162, 1, 0
        %v164 = vcvt.s32.f32 %v163
        %vm165 = vcmask 1040384
        %v166 = vsel %vm165, %v122, %v128
        %vm167 = vcmask 1041408
        %v168 = vsel %vm167, %v166, %v134
        %vm169 = vcmask 1042432
        %v170 = vsel %vm169, %v168, %v140
        %vm171 = vcmask 1043456
        %v172 = vsel %vm171, %v170, %v146
        %vm173 = vcmask 1044480
        %v174 = vsel %vm173, %v172, %v152
        %vm175 = vcmask 1045504
        %v176 = vsel %vm175, %v174, %v158
        %vm177 = vcmask 1046528
        %v178 = vsel %vm177, %v176, %v164
        %v179 = vld [vmem:[#allocation4] sm:$0xff]
        %v180 = vld [vmem:[#allocation4 + $0x8] sm:$0xff]
        %v181 = vld [vmem:[#allocation4 + $0x10] sm:$0xff]
        %v182 = vld [vmem:[#allocation4 + $0x18] sm:$0xff]
        %v183 = vld [vmem:[#allocation4 + $0x20] sm:$0xff]
        %v184 = vld [vmem:[#allocation4 + $0x28] sm:$0xff]
        %v185 = vld [vmem:[#allocation4 + $0x30] sm:$0xff]
        %v186 = vld [vmem:[#allocation4 + $0x38] sm:$0xff]
        %vm187 = vcmask 523264
        %v189 = vsel %vm187, %v178, 0
        %191 = vmatprep.subr.mxu0 0.0
        %192 = vmatpush1.msra.mxu0 0.0
        %193 = vmatprep.subr.mxu0 0.0
        %194 = vmatpush1.msra.mxu0 0.0
        %195 = vmatprep.subr.mxu0 0.0
        %196 = vmatpush1.msra.mxu0 0.0
        %197 = vmatprep.subr.mxu0 0.0
        %198 = vmatpush1.msra.mxu0 0.0
        %199 = vmatprep.subr.mxu0 0.0
        %200 = vmatpush1.msra.mxu0 0.0
        %201 = vmatprep.subr.mxu0 0.0
        %202 = vmatpush1.msra.mxu0 0.0
        %203 = vmatprep.subr.mxu0 0.0
        %204 = vmatpush1.msra.mxu0 0.0
        %205 = vmatprep.subr.mxu0 0.0
        %206 = vmatpush1.msra.mxu0 0.0
        %207 = vmatprep.subr.mxu0 0.0
        %208 = vmatpush1.msra.mxu0 %v186
        %209 = vmatprep.subr.mxu0 0.0
        %210 = vmatpush1.msra.mxu0 %v185
        %211 = vmatprep.subr.mxu0 0.0
        %212 = vmatpush1.msra.mxu0 %v184
        %213 = vmatprep.subr.mxu0 0.0
        %214 = vmatpush1.msra.mxu0 %v183
        %215 = vmatprep.subr.mxu0 0.0
        %216 = vmatpush1.msra.mxu0 %v182
        %217 = vmatprep.subr.mxu0 0.0
        %218 = vmatpush1.msra.mxu0 %v181
        %219 = vmatprep.subr.mxu0 0.0
        %220 = vmatpush1.msra.mxu0 %v180
        %221 = vmatprep.subr.mxu0 0.0
        %222 = vmatpush1.msra.mxu0 %v179
        %223 = vmatprep.subr.mxu0 0.0
        %224 = vmatpush2.msra.mxu0 0.0
        %225 = vmatprep.subr.mxu0 0.0
        %226 = vmatpush2.msra.mxu0 0.0
        %227 = vmatprep.subr.mxu0 0.0
        %228 = vmatpush2.msra.mxu0 0.0
        %229 = vmatprep.subr.mxu0 0.0
        %230 = vmatpush2.msra.mxu0 0.0
        %231 = vmatprep.subr.mxu0 0.0
        %232 = vmatpush2.msra.mxu0 0.0
        %233 = vmatprep.subr.mxu0 0.0
        %234 = vmatpush2.msra.mxu0 0.0
        %235 = vmatprep.subr.mxu0 0.0
        %236 = vmatpush2.msra.mxu0 0.0
        %237 = vmatprep.subr.mxu0 0.0
        %238 = vmatpush2.msra.mxu0 0.0
        %239 = vmatprep.subr.mxu0 0.0
        %240 = vmatpush2.msra.mxu0 0.0
        %241 = vmatprep.subr.mxu0 0.0
        %242 = vmatpush2.msra.mxu0 0.0
        %243 = vmatprep.subr.mxu0 0.0
        %244 = vmatpush2.msra.mxu0 0.0
        %245 = vmatprep.subr.mxu0 0.0
        %246 = vmatpush2.msra.mxu0 0.0
        %247 = vmatprep.subr.mxu0 0.0
        %248 = vmatpush2.msra.mxu0 0.0
        %249 = vmatprep.subr.mxu0 0.0
        %250 = vmatpush2.msra.mxu0 0.0
        %251 = vmatprep.subr.mxu0 0.0
        %252 = vmatpush2.msra.mxu0 0.0
        %253 = vmatprep.subr.mxu0 0.0
        %254 = vmatpush2.msra.mxu0 0.0
        %255 = vmatprep.mubr.f32.mxu0 0.0
        %256 = vmatmul.mubr.f32.gmra.mxu0 %v189
        %v257 = vpop.f32.mrf.mxu0
        %v258 = vadd.f32 0.0, %v257
        %v259 = vpop.f32.mrf.mxu0
        %260 = vdwg.mxu0
        %261 = vst [vmem:[%s114] sm:$0xff] %v258
        %s262 = sand.u32 %s50, 1
        %s263 = scalar_lea.sflag [#allocation6], %s262
        %s264 = sand.u32 %s50, 1
        %s265 = smul.addr %s264, 8
        %s266 = scalar_lea.vmem [#allocation7], %s265
        // Predicated region
        $region29: #{tpu_custom_call.1} parent=23 // pred_check
          %p267 = pneg %p60
        $region30: #{tpu_custom_call.1} parent=23 // pred_check_branch
          %269 = sbr.rel (%p267) target = $region32
        $region31: #{tpu_custom_call.1} parent=23 // pred_region
          %s271 = ssub.s32 128, 128
          %272 = vsyncadd %s263, %s271
          %s273 = smul.addr %s21, 128
          %s274 = scalar_lea.hbm %s2, %s273
          %s276 = sshll.u32 %s266, 4
          %s277 = int_to_ptr.vmem [resolvable:$true] %s276
          %279 = dma.vmem_to_hbm [thread:$0]  %s277, 128, %s274, %s263
        $region32: #{tpu_custom_call.1} parent=23 // pred_fallthru
          _
      $region24: #{tpu_custom_call.1} parent=5 // pred_fallthru
        _
      %p280 = scmp.le.s32.totalorder 2, %s16
      // Predicated region
      $region33: #{tpu_custom_call.1} parent=5 // pred_check
        %p281 = pneg %p280
      $region34: #{tpu_custom_call.1} parent=5 // pred_check_branch
        %283 = sbr.rel (%p281) target = $region36
      $region35: #{tpu_custom_call.1} parent=5 // pred_region
        %s284 = ssub.s32 %s16, 2
        // Predicated region
        $region37: #{tpu_custom_call.1} parent=35 // pred_check
          %p285 = pneg %p66
        $region38: #{tpu_custom_call.1} parent=35 // pred_check_branch
          %287 = sbr.rel (%p285) target = $region40
        $region39: #{tpu_custom_call.1} parent=35 // pred_region
          %s288 = sand.u32 %s51, 1
          %s289 = scalar_lea.sflag [#allocation6], %s288
          %s290 = sand.u32 %s51, 1
          %s291 = smul.addr %s290, 8
          %s292 = scalar_lea.vmem [#allocation7], %s291
          %293 = dma.done %s289, 128
        $region40: #{tpu_custom_call.1} parent=35 // pred_fallthru
          _
      $region36: #{tpu_custom_call.1} parent=5 // pred_fallthru
        _
    $region6: #{tpu_custom_call.1} parent=1 // loop_footer
      %s20 = sadd.s32 1, %s16
    $region7: #{tpu_custom_call.1} parent=1 // loop_footer_branch
      %15 = sbr.rel target = $region3
    $region8: #{tpu_custom_call.1} parent=1 // loop_exit
      _
    %294 = vsyncpa [#allocation5], 1
    %s295 = scalar_lea.sflag [#allocation5], 1
    %296 = vsyncpa %s295, 1
    %297 = vsyncpa [#allocation6], 1
    %s298 = scalar_lea.sflag [#allocation6], 1
    %299 = vsyncpa %s298, 1

</llo_original>
